<compile_context>
chip_gen: v7x
topology: tpu7x:2x2x1
jax: 0.10.0
libtpu: 0.0.40
codegen_flags: <defaults>
</compile_context>

<pallas_src>
import functools

import jax
import jax.numpy as jnp
from jax.experimental import pallas as pl
from jax.experimental.pallas import tpu as pltpu

_BN_EPS = 1e-5
_OUT_ROWS = 8                      # sublane-padded output: row 0 = mu, row 1 = sigma
_VMEM_LIMIT = 32 * 1024 * 1024     # explicit scoped-VMEM budget (safe on v5e/v6e/v7x)


def _stats_kernel(x_ref, s_ref, *, batch, tile_rows):
    """Accumulate per-feature [sum, sum_of_squares] over the batch grid."""
    i = pl.program_id(0)

    x = x_ref[...].astype(jnp.float32)
    # Mask padded tail rows of the last tile so they don't pollute the stats.
    row = jax.lax.broadcasted_iota(jnp.int32, x.shape, 0) + i * tile_rows
    x = jnp.where(row < batch, x, 0.0)

    s = jnp.sum(x, axis=0, keepdims=True)          # (1, n_input)
    sq = jnp.sum(x * x, axis=0, keepdims=True)     # (1, n_input)

    @pl.when(i == 0)
    def _():
        s_ref[...] = jnp.zeros_like(s_ref)

    s_ref[...] += jnp.concatenate([s, sq], axis=0)


def _sdn_kernel(x_ref, mean_ref, rstd_ref, w1_ref, b1_ref, w2p_ref, b2p_ref,
                out_ref, *, matmul_dtype):
    """BatchNorm(precomputed stats) -> Linear -> ELU -> Linear -> (mu, sigma)."""
    x = x_ref[...].astype(jnp.float32)

    # BatchNorm1d(affine=False): normalize with the full-batch statistics.
    xn = (x - mean_ref[...]) * rstd_ref[...]                       # (TB, n_in)

    # Linear(n_input, n_hidden) + ELU(alpha=1).  bf16 MXU, f32 accumulation.
    h = jnp.dot(xn.astype(matmul_dtype), w1_ref[...].astype(matmul_dtype),
                preferred_element_type=jnp.float32) + b1_ref[...]
    h = jnp.where(h > 0.0, h, jnp.expm1(h))                        # (TB, n_hid)

    # Linear(n_hidden, 2), produced transposed: (_OUT_ROWS, TB).  NT-form
    # dot_general keeps batch on the lane axis -> lane-dense output stores.
    y = jax.lax.dot_general(
        w2p_ref[...].astype(matmul_dtype), h.astype(matmul_dtype),
        dimension_numbers=(((1,), (1,)), ((), ())),
        preferred_element_type=jnp.float32) + b2p_ref[...]         # (8, TB)

    # Row 0 -> mu ; row 1 -> sigma = exp(clip(log_sigma, -20, 20)).
    row = jax.lax.broadcasted_iota(jnp.int32, y.shape, 0)
    out_ref[...] = jnp.where(row == 0, y, jnp.exp(jnp.clip(y, -20.0, 20.0)))


def sdn_forward(x, w1, b1, w2, b2, *, tile_rows=1024,
                matmul_dtype=jnp.bfloat16):
    """SDN forward.  Returns (mu, sigma) of the Normal distribution, shape (B,).

    x : (batch, n_input)
    w1: (n_input, n_hidden)   (transposed vs. PyTorch Linear.weight)
    b1: (1, n_hidden)
    w2: (n_hidden, 2)
    b2: (1, 2)
    """
    batch, n_input = x.shape
    n_hidden = w1.shape[1]

    tb = min(tile_rows, batch)
    num_tiles = pl.cdiv(batch, tb)

    # ---- Pass 1: full-batch BatchNorm statistics (grid reduction). ----------
    stats = pl.pallas_call(
        functools.partial(_stats_kernel, batch=batch, tile_rows=tb),
        out_shape=jax.ShapeDtypeStruct((2, n_input), jnp.float32),
        grid=(num_tiles,),
        in_specs=[pl.BlockSpec((tb, n_input), lambda i: (i, 0))],
        out_specs=pl.BlockSpec((2, n_input), lambda i: (0, 0)),
        compiler_params=pltpu.CompilerParams(
            dimension_semantics=("arbitrary",),
            vmem_limit_bytes=_VMEM_LIMIT),
    )(x)

    inv_b = 1.0 / float(batch)
    mean = stats[0:1, :] * inv_b                                   # (1, n_input)
    # Single-traversal E[x^2] - mean^2 (one HBM pass over x); clamp at 0 to
    # guard against cancellation for large-magnitude / tiny-variance features.
    var = jnp.maximum(stats[1:2, :] * inv_b - mean * mean, 0.0)
    rstd = jax.lax.rsqrt(var + _BN_EPS)                            # (1, n_input)

    # Second-layer weights / bias, transposed and padded to 8 sublane rows
    # (row 0 = mu head, row 1 = log_sigma head, rows 2..7 unused padding).
    w2p = jnp.zeros((_OUT_ROWS, n_hidden), jnp.float32).at[0:2, :].set(w2.T)
    b2p = jnp.zeros((_OUT_ROWS, 1), jnp.float32).at[0:2, :].set(b2.reshape(2, 1))

    # ---- Pass 2: normalize + MLP over a "parallel" batch grid. --------------
    out = pl.pallas_call(
        functools.partial(_sdn_kernel, matmul_dtype=matmul_dtype),
        out_shape=jax.ShapeDtypeStruct((_OUT_ROWS, batch), jnp.float32),
        grid=(num_tiles,),
        in_specs=[
            pl.BlockSpec((tb, n_input), lambda i: (i, 0)),        # x tile
            pl.BlockSpec((1, n_input), lambda i: (0, 0)),         # mean
            pl.BlockSpec((1, n_input), lambda i: (0, 0)),         # rstd
            pl.BlockSpec((n_input, n_hidden), lambda i: (0, 0)),  # w1
            pl.BlockSpec((1, n_hidden), lambda i: (0, 0)),        # b1
            pl.BlockSpec((_OUT_ROWS, n_hidden), lambda i: (0, 0)),  # w2 (padded)
            pl.BlockSpec((_OUT_ROWS, 1), lambda i: (0, 0)),         # b2 (padded)
        ],
        out_specs=pl.BlockSpec((_OUT_ROWS, tb), lambda i: (0, i)),
        compiler_params=pltpu.CompilerParams(
            dimension_semantics=("parallel",),
            vmem_limit_bytes=_VMEM_LIMIT),
    )(x, mean, rstd, w1, b1, w2p, b2p)

    mu = out[0, :]
    sigma = out[1, :]
    return mu, sigma


def sdn_reference(x, w1, b1, w2, b2):
    """Pure-JAX reference of the PyTorch module's forward."""
    x = x.astype(jnp.float32)
    mean = jnp.mean(x, axis=0, keepdims=True)
    var = jnp.mean((x - mean) ** 2, axis=0, keepdims=True)
    xn = (x - mean) / jnp.sqrt(var + _BN_EPS)
    h = xn @ w1 + b1
    h = jnp.where(h > 0.0, h, jnp.expm1(h))
    y = h @ w2 + b2
    mu = y[:, 0]
    sigma = jnp.exp(jnp.clip(y[:, 1], -20.0, 20.0))
    return mu, sigma


def init_params(key, n_input, n_hidden):
    """Deterministic synthetic params (PyTorch-Linear-style uniform init)."""
    k1, k2, k3, k4 = jax.random.split(key, 4)
    lim1 = 1.0 / jnp.sqrt(jnp.float32(n_input))
    lim2 = 1.0 / jnp.sqrt(jnp.float32(n_hidden))
    w1 = jax.random.uniform(k1, (n_input, n_hidden), jnp.float32, -lim1, lim1)
    b1 = jax.random.uniform(k2, (1, n_hidden), jnp.float32, -lim1, lim1)
    w2 = jax.random.uniform(k3, (n_hidden, 2), jnp.float32, -lim2, lim2)
    b2 = jax.random.uniform(k4, (1, 2), jnp.float32, -lim2, lim2)
    return w1, b1, w2, b2


if __name__ == "__main__":
    n_input, n_hidden, batch = 32, 32, 256

    key = jax.random.PRNGKey(0)
    kx, kp = jax.random.split(key)
    x = jax.random.normal(kx, (batch, n_input), jnp.float32)
    w1, b1, w2, b2 = init_params(kp, n_input, n_hidden)

    # tile_rows=128 -> a 2-step grid, exercising the tiled stats accumulation
    # and the "parallel" batch grid.  (Production: leave at 1024+.)
    mu, sigma = sdn_forward(x, w1, b1, w2, b2, tile_rows=128)
    jax.block_until_ready((mu, sigma))

    mu_ref, sigma_ref = sdn_reference(x, w1, b1, w2, b2)

    assert mu.shape == (batch,) and sigma.shape == (batch,)
    assert bool(jnp.all(sigma > 0.0))
    # Loose tolerance accounts for bf16 MXU operands (f32 accumulation).
    assert bool(jnp.allclose(mu, mu_ref, rtol=5e-2, atol=5e-2)), "mu mismatch"
    assert bool(jnp.allclose(sigma, sigma_ref, rtol=5e-2, atol=5e-2)), "sigma mismatch"
    print("KERNEL_OK")
</pallas_src>

<mosaic_0001>
module attributes {stable_mosaic.version = 11 : i64} {
  func.func @_stats_kernel(%arg0: i32, %arg1: memref<128x32xf32, #tpu.memory_space<vmem>>, %arg2: memref<2x32xf32, #tpu.memory_space<vmem>>) attributes {dimension_semantics = [#tpu.dimension_semantics<arbitrary>], iteration_bounds = array<i64: 2>, scalar_prefetch = 0 : i64, scratch_operands = 0 : i64, tpu.core_type = #tpu.core_type<tc>, window_params = [{transform_indices = @transform_0, window_bounds = array<i64: 128, 32>}, {pipeline_mode = #tpu.pipeline_mode<synchronous>, transform_indices = @transform_1, window_bounds = array<i64: 2, 32>}]} {
    %c0 = arith.constant 0 : index
    %c0_0 = arith.constant 0 : index
    %0 = vector.load %arg1[%c0, %c0_0] : memref<128x32xf32, #tpu.memory_space<vmem>>, vector<128x32xf32>
    %1 = tpu.iota {dimensions = array<i32: 0>} : vector<128x32xi32>
    %c128_i32 = arith.constant 128 : i32
    %2 = arith.muli %arg0, %c128_i32 : i32
    %3 = vector.broadcast %2 : i32 to vector<128x32xi32>
    %4 = arith.addi %1, %3 : vector<128x32xi32>
    %c256_i32 = arith.constant 256 : i32
    %5 = vector.broadcast %c256_i32 : i32 to vector<128x32xi32>
    %6 = arith.cmpi slt, %4, %5 : vector<128x32xi32>
    %cst = arith.constant 0.000000e+00 : f32
    %7 = vector.broadcast %cst : f32 to vector<128x32xf32>
    %8 = arith.select %6, %0, %7 : vector<128x32xi1>, vector<128x32xf32>
    %cst_1 = arith.constant dense<0.000000e+00> : vector<32xf32>
    %9 = vector.multi_reduction <add>, %8, %cst_1 [0] : vector<128x32xf32> to vector<32xf32>
    %10 = vector.shape_cast %9 : vector<32xf32> to vector<1x32xf32>
    %11 = arith.mulf %8, %8 : vector<128x32xf32>
    %cst_2 = arith.constant dense<0.000000e+00> : vector<32xf32>
    %12 = vector.multi_reduction <add>, %11, %cst_2 [0] : vector<128x32xf32> to vector<32xf32>
    %13 = vector.shape_cast %12 : vector<32xf32> to vector<1x32xf32>
    %c0_i32 = arith.constant 0 : i32
    %14 = arith.cmpi eq, %arg0, %c0_i32 : i32
    %15 = arith.extui %14 : i1 to i32
    %c0_i32_3 = arith.constant 0 : i32
    %16 = arith.cmpi ne, %15, %c0_i32_3 : i32
    scf.if %16 {
      %cst_8 = arith.constant 0.000000e+00 : f32
      %21 = vector.broadcast %cst_8 : f32 to vector<2x32xf32>
      %c0_9 = arith.constant 0 : index
      %c0_10 = arith.constant 0 : index
      %22 = vector.load %arg2[%c0_9, %c0_10] : memref<2x32xf32, #tpu.memory_space<vmem>>, vector<2x32xf32>
      tpu.vector_store %arg2[%c0_9, %c0_10], %21 {strides = array<i32>} : memref<2x32xf32, #tpu.memory_space<vmem>>, vector<2x32xf32>,
    } else {
    }
    %c0_4 = arith.constant 0 : index
    %c0_5 = arith.constant 0 : index
    %17 = vector.load %arg2[%c0_4, %c0_5] : memref<2x32xf32, #tpu.memory_space<vmem>>, vector<2x32xf32>
    %18 = tpu.concatenate %10, %13 in 0 : vector<1x32xf32>, vector<1x32xf32> -> vector<2x32xf32>
    %19 = arith.addf %17, %18 : vector<2x32xf32>
    %c0_6 = arith.constant 0 : index
    %c0_7 = arith.constant 0 : index
    %20 = vector.load %arg2[%c0_6, %c0_7] : memref<2x32xf32, #tpu.memory_space<vmem>>, vector<2x32xf32>
    tpu.vector_store %arg2[%c0_6, %c0_7], %19 {strides = array<i32>} : memref<2x32xf32, #tpu.memory_space<vmem>>, vector<2x32xf32>,
    return
  }
  func.func @transform_0(%arg0: i32) -> (i32, i32) {
    %c0_i32 = arith.constant 0 : i32
    %c0_i32_0 = arith.constant 0 : i32
    return %arg0, %c0_i32 : i32, i32
  }
  func.func @transform_1(%arg0: i32) -> (i32, i32) {
    %c0_i32 = arith.constant 0 : i32
    %c0_i32_0 = arith.constant 0 : i32
    %c0_i32_1 = arith.constant 0 : i32
    return %c0_i32, %c0_i32_0 : i32, i32
  }
}

</mosaic_0001>

<llo_original>
// kernel: tpu_custom_call.1
$region0: #{tpu_custom_call.1}
  #allocation0 [shape = 'u32[]', space=smem, size = 0x4, offset = 0x4, fixed_abs, tag = 'smem constant byte address 0x4 - core index']
  #allocation1 [shape = 'u32[144,128]{1,0:T(1,128)}', space=vmem, size = 0x12000, scoped, tag = 'internal scratch']
  %s0 = inlined_call_operand.vmem [shape: f32[256,32], index: 0, kind: input, shape index: {}]
  %s1 = inlined_call_operand.hbm [shape: f32[2,32], index: 1, kind: output, shape index: {}]
  %s2 = sld [smem:[#allocation0]]
  $region41: #{tpu_custom_call.1} parent=0
    _
  %s4 = ssub.s32 1, %s2
  %s5 = scalar_select 0, %s4, %s2
  $region1: #{tpu_custom_call.1} parent=0
    #allocation2 [shape = 'u8[1024]{0}', space=vmem, size = 0x400, scoped, tag = 'output window, operand 0, single buffered']
    #allocation3 [shape = 's32[2]{0}', space=sflag, size = 0x8, scoped, tag = 'scoped memory for tpu_custom_call.1']
    %6 = vsyncpa [#allocation3], 0
    loop: start=0, step=1, limit=4
    $region2: #{tpu_custom_call.1} parent=1 // loop_pre_header
      _
    $region3: #{tpu_custom_call.1} parent=1 // loop_header
      %s8 = sphi 0, %s12
      %p9 = scmp.ge.s32.totalorder %s8, 4
      %s18 = sphi 0, %s20
      %s21 = sphi 0, %s18
      %s22 = sphi 0, %s21
      %s38 = sphi 0, %s22
      %s42 = sphi 0, %s42
      %s44 = sphi 0, %s42
      %s45 = sphi 0, %s44
      %s59 = sphi 0, %s45
    $region4: #{tpu_custom_call.1} parent=1 // loop_header_branch
      %11 = sbr.rel (%p9) target = $region8
    $region5: #{tpu_custom_call.1} parent=1 // loop_body
      %s13 = ssub.s32 %s8, 1
      %s14 = ssub.s32 %s8, 2
      %s15 = sadd.s32 %s8, 1
      %s16 = ssub.s32 %s8, %s15
      %p17 = scmp.eq.s32.totalorder %s16, 0
      %s19 = sadd.s32 %s18, 1
      %s20 = scalar_select %p17, %s18, %s19
      %p23 = pneg %p17
      %p24 = scmp.eq.s32.totalorder %s8, 1
      %p25 = por %p23, %p24
      %p26 = scmp.ne.s32.totalorder %s18, %s21
      %p27 = scmp.eq.s32.totalorder %s8, 0
      %p28 = por %p26, %p27
      %p29 = scmp.ne.s32.totalorder %s18, %s21
      %p30 = scmp.eq.s32.totalorder %s13, 1
      %p31 = por %p29, %p30
      %p32 = scmp.ne.s32.totalorder %s21, %s22
      %p33 = scmp.eq.s32.totalorder %s13, 0
      %p34 = por %p32, %p33
      %p35 = scmp.ne.s32.totalorder %s21, %s22
      %p36 = scmp.eq.s32.totalorder %s14, 1
      %p37 = por %p35, %p36
      %p39 = scmp.ne.s32.totalorder %s22, %s38
      %p40 = scmp.eq.s32.totalorder %s14, 0
      %p41 = por %p39, %p40
      %s43 = sadd.s32 %s42, 1
      %p46 = scmp.eq.s32.totalorder %s8, 1
      %p47 = scmp.ne.s32.totalorder %s42, %s44
      %p48 = scmp.eq.s32.totalorder %s8, 0
      %p49 = por %p47, %p48
      %p50 = scmp.ne.s32.totalorder %s42, %s44
      %p51 = scmp.eq.s32.totalorder %s13, 1
      %p52 = por %p50, %p51
      %p53 = scmp.ne.s32.totalorder %s44, %s45
      %p54 = scmp.eq.s32.totalorder %s13, 0
      %p55 = por %p53, %p54
      %p56 = scmp.ne.s32.totalorder %s44, %s45
      %p57 = scmp.eq.s32.totalorder %s14, 1
      %p58 = por %p56, %p57
      %p60 = scmp.ne.s32.totalorder %s45, %s59
      %p61 = scmp.eq.s32.totalorder %s14, 0
      %p62 = por %p60, %p61
      %p63 = scmp.le.s32.totalorder 1, %s8
      %p64 = scmp.lt.s32.totalorder %s8, 3
      %p65 = pnand %p63, %p64
      %p66 = pneg %p65
      // Predicated region
      $region9: #{tpu_custom_call.1} parent=5 // pred_check
        _
      $region10: #{tpu_custom_call.1} parent=5 // pred_check_branch
        %68 = sbr.rel (%p65) target = $region12
      $region11: #{tpu_custom_call.1} parent=5 // pred_region
        %s69 = ssub.s32 %s8, 1
      $region12: #{tpu_custom_call.1} parent=5 // pred_fallthru
        _
      %p70 = scmp.lt.s32.totalorder %s8, 2
      // Predicated region
      $region13: #{tpu_custom_call.1} parent=5 // pred_check
        %p71 = pneg %p70
      $region14: #{tpu_custom_call.1} parent=5 // pred_check_branch
        %73 = sbr.rel (%p71) target = $region16
      $region15: #{tpu_custom_call.1} parent=5 // pred_region
        // Predicated region
        $region17: #{tpu_custom_call.1} parent=15 // pred_check
          %p74 = pneg %p28
        $region18: #{tpu_custom_call.1} parent=15 // pred_check_branch
          %76 = sbr.rel (%p74) target = $region20
        $region19: #{tpu_custom_call.1} parent=15 // pred_region
          %s77 = smul.u32 16, %s8
          %p78 = scmp.lt.s32.totalorder %s77, 31
          %s79 = scalar_select %p78, %s77, 31
          %s80 = smul.addr %s79, 8
          %s81 = scalar_lea.vmem %s0, %s80
          %s82 = smul.u32 16, %s8
        $region20: #{tpu_custom_call.1} parent=15 // pred_fallthru
          _
      $region16: #{tpu_custom_call.1} parent=5 // pred_fallthru
        _
      %p83 = scmp.le.s32.totalorder 1, %s8
      %p84 = scmp.lt.s32.totalorder %s8, 3
      %p85 = pnand %p83, %p84
      %p86 = pneg %p85
      // Predicated region
      $region21: #{tpu_custom_call.1} parent=5 // pred_check
        _
      $region22: #{tpu_custom_call.1} parent=5 // pred_check_branch
        %88 = sbr.rel (%p85) target = $region24
      $region23: #{tpu_custom_call.1} parent=5 // pred_region
        %s89 = ssub.s32 %s8, 1
        %s90 = smul.u32 16, %s13
        %p91 = scmp.lt.s32.totalorder %s90, 31
        %s92 = scalar_select %p91, %s90, 31
        %s93 = smul.addr %s92, 8
        %s94 = scalar_lea.vmem %s0, %s93
        %p95 = pneg %p34
        %p96 = pneg %p31
        %p97 = pneg %p55
        %p98 = pneg %p52
        %s99 = smul.u32 16, %s13
        %p100 = scmp.lt.s32.totalorder %s99, 31
        %s101 = scalar_select %p100, %s99, 31
        %s102 = smul.addr %s101, 8
        %s103 = scalar_lea.vmem %s0, %s102
        %s104 = smul.u32 16, %s13
        %v105 = vld [vmem:[%s103] sm:$0xff]
        %v106 = vld [vmem:[%s103 + $0x8] sm:$0xff]
        %v107 = vld [vmem:[%s103 + $0x10] sm:$0xff]
        %v108 = vld [vmem:[%s103 + $0x18] sm:$0xff]
        %v109 = vld [vmem:[%s103 + $0x20] sm:$0xff]
        %v110 = vld [vmem:[%s103 + $0x28] sm:$0xff]
        %v111 = vld [vmem:[%s103 + $0x30] sm:$0xff]
        %v112 = vld [vmem:[%s103 + $0x38] sm:$0xff]
        %v113 = vld [vmem:[%s103 + $0x40] sm:$0xff]
        %v114 = vld [vmem:[%s103 + $0x48] sm:$0xff]
        %v115 = vld [vmem:[%s103 + $0x50] sm:$0xff]
        %v116 = vld [vmem:[%s103 + $0x58] sm:$0xff]
        %v117 = vld [vmem:[%s103 + $0x60] sm:$0xff]
        %v118 = vld [vmem:[%s103 + $0x68] sm:$0xff]
        %v119 = vld [vmem:[%s103 + $0x70] sm:$0xff]
        %v120 = vld [vmem:[%s103 + $0x78] sm:$0xff]
        %v121 = vlaneseq
        %v122 = vshrl.u32 %v121, 7
        %v123 = vadd.s32 %v122, 8
        %v124 = vadd.s32 %v122, 16
        %v125 = vadd.s32 %v122, 24
        %v126 = vadd.s32 %v122, 32
        %v127 = vadd.s32 %v122, 40
        %v128 = vadd.s32 %v122, 48
        %v129 = vadd.s32 %v122, 56
        %v130 = vadd.s32 %v122, 64
        %v131 = vadd.s32 %v122, 72
        %v132 = vadd.s32 %v122, 80
        %v133 = vadd.s32 %v122, 88
        %v134 = vadd.s32 %v122, 96
        %v135 = vadd.s32 %v122, 104
        %v136 = vadd.s32 %v122, 112
        %v137 = vadd.s32 %v122, 120
        %s138 = smul.u32 %s13, 128
        %v139 = vstv %s138
        %v140 = vadd.s32 %v122, %v139
        %v141 = vadd.s32 %v123, %v139
        %v142 = vadd.s32 %v124, %v139
        %v143 = vadd.s32 %v125, %v139
        %v144 = vadd.s32 %v126, %v139
        %v145 = vadd.s32 %v127, %v139
        %v146 = vadd.s32 %v128, %v139
        %v147 = vadd.s32 %v129, %v139
        %v148 = vadd.s32 %v130, %v139
        %v149 = vadd.s32 %v131, %v139
        %v150 = vadd.s32 %v132, %v139
        %v151 = vadd.s32 %v133, %v139
        %v152 = vadd.s32 %v134, %v139
        %v153 = vadd.s32 %v135, %v139
        %v154 = vadd.s32 %v136, %v139
        %v155 = vadd.s32 %v137, %v139
        %vm156 = vcmp.lt.s32.totalorder %v140, 256
        %vm157 = vcmp.lt.s32.totalorder %v141, 256
        %vm158 = vcmp.lt.s32.totalorder %v142, 256
        %vm159 = vcmp.lt.s32.totalorder %v143, 256
        %vm160 = vcmp.lt.s32.totalorder %v144, 256
        %vm161 = vcmp.lt.s32.totalorder %v145, 256
        %vm162 = vcmp.lt.s32.totalorder %v146, 256
        %vm163 = vcmp.lt.s32.totalorder %v147, 256
        %vm164 = vcmp.lt.s32.totalorder %v148, 256
        %vm165 = vcmp.lt.s32.totalorder %v149, 256
        %vm166 = vcmp.lt.s32.totalorder %v150, 256
        %vm167 = vcmp.lt.s32.totalorder %v151, 256
        %vm168 = vcmp.lt.s32.totalorder %v152, 256
        %vm169 = vcmp.lt.s32.totalorder %v153, 256
        %vm170 = vcmp.lt.s32.totalorder %v154, 256
        %vm171 = vcmp.lt.s32.totalorder %v155, 256
        %v172 = vsel %vm156, %v105, 0.0
        %v173 = vsel %vm157, %v106, 0.0
        %v174 = vsel %vm158, %v107, 0.0
        %v175 = vsel %vm159, %v108, 0.0
        %v176 = vsel %vm160, %v109, 0.0
        %v177 = vsel %vm161, %v110, 0.0
        %v178 = vsel %vm162, %v111, 0.0
        %v179 = vsel %vm163, %v112, 0.0
        %v180 = vsel %vm164, %v113, 0.0
        %v181 = vsel %vm165, %v114, 0.0
        %v182 = vsel %vm166, %v115, 0.0
        %v183 = vsel %vm167, %v116, 0.0
        %v184 = vsel %vm168, %v117, 0.0
        %v185 = vsel %vm169, %v118, 0.0
        %v186 = vsel %vm170, %v119, 0.0
        %v187 = vsel %vm171, %v120, 0.0
        %vm188 = vcmask 261120
        %v189 = vsel %vm188, %v172, 0.0
        %v190 = vsel %vm188, %v173, 0.0
        %v191 = vadd.f32 %v189, %v190
        %v192 = vsel %vm188, %v174, 0.0
        %v193 = vadd.f32 %v191, %v192
        %v194 = vsel %vm188, %v175, 0.0
        %v195 = vadd.f32 %v193, %v194
        %v196 = vsel %vm188, %v176, 0.0
        %v197 = vadd.f32 %v195, %v196
        %v198 = vsel %vm188, %v177, 0.0
        %v199 = vadd.f32 %v197, %v198
        %v200 = vsel %vm188, %v178, 0.0
        %v201 = vadd.f32 %v199, %v200
        %v202 = vsel %vm188, %v179, 0.0
        %v203 = vadd.f32 %v201, %v202
        %v204 = vsel %vm188, %v180, 0.0
        %v205 = vadd.f32 %v203, %v204
        %v206 = vsel %vm188, %v181, 0.0
        %v207 = vadd.f32 %v205, %v206
        %v208 = vsel %vm188, %v182, 0.0
        %v209 = vadd.f32 %v207, %v208
        %v210 = vsel %vm188, %v183, 0.0
        %v211 = vadd.f32 %v209, %v210
        %v212 = vsel %vm188, %v184, 0.0
        %v213 = vadd.f32 %v211, %v212
        %v214 = vsel %vm188, %v185, 0.0
        %v215 = vadd.f32 %v213, %v214
        %v216 = vsel %vm188, %v186, 0.0
        %v217 = vadd.f32 %v215, %v216
        %v218 = vsel %vm188, %v187, 0.0
        %v219 = vadd.f32 %v217, %v218
        %v220 = vrot.slane %v219, 4
        %v221 = vadd.f32 %v219, %v220
        %v222 = vrot.slane %v221, 2
        %v223 = vadd.f32 %v221, %v222
        %v224 = vrot.slane %v223, 1
        %v225 = vadd.f32 %v223, %v224
        %v226 = vmul.f32 %v172, %v172
        %v227 = vmul.f32 %v173, %v173
        %v228 = vmul.f32 %v174, %v174
        %v229 = vmul.f32 %v175, %v175
        %v230 = vmul.f32 %v176, %v176
        %v231 = vmul.f32 %v177, %v177
        %v232 = vmul.f32 %v178, %v178
        %v233 = vmul.f32 %v179, %v179
        %v234 = vmul.f32 %v180, %v180
        %v235 = vmul.f32 %v181, %v181
        %v236 = vmul.f32 %v182, %v182
        %v237 = vmul.f32 %v183, %v183
        %v238 = vmul.f32 %v184, %v184
        %v239 = vmul.f32 %v185, %v185
        %v240 = vmul.f32 %v186, %v186
        %v241 = vmul.f32 %v187, %v187
        %v242 = vsel %vm188, %v226, 0.0
        %v243 = vsel %vm188, %v227, 0.0
        %v244 = vadd.f32 %v242, %v243
        %v245 = vsel %vm188, %v228, 0.0
        %v246 = vadd.f32 %v244, %v245
        %v247 = vsel %vm188, %v229, 0.0
        %v248 = vadd.f32 %v246, %v247
        %v249 = vsel %vm188, %v230, 0.0
        %v250 = vadd.f32 %v248, %v249
        %v251 = vsel %vm188, %v231, 0.0
        %v252 = vadd.f32 %v250, %v251
        %v253 = vsel %vm188, %v232, 0.0
        %v254 = vadd.f32 %v252, %v253
        %v255 = vsel %vm188, %v233, 0.0
        %v256 = vadd.f32 %v254, %v255
        %v257 = vsel %vm188, %v234, 0.0
        %v258 = vadd.f32 %v256, %v257
        %v259 = vsel %vm188, %v235, 0.0
        %v260 = vadd.f32 %v258, %v259
        %v261 = vsel %vm188, %v236, 0.0
        %v262 = vadd.f32 %v260, %v261
        %v263 = vsel %vm188, %v237, 0.0
        %v264 = vadd.f32 %v262, %v263
        %v265 = vsel %vm188, %v238, 0.0
        %v266 = vadd.f32 %v264, %v265
        %v267 = vsel %vm188, %v239, 0.0
        %v268 = vadd.f32 %v266, %v267
        %v269 = vsel %vm188, %v240, 0.0
        %v270 = vadd.f32 %v268, %v269
        %v271 = vsel %vm188, %v241, 0.0
        %v272 = vadd.f32 %v270, %v271
        %v273 = vrot.slane %v272, 4
        %v274 = vadd.f32 %v272, %v273
        %v275 = vrot.slane %v274, 2
        %v276 = vadd.f32 %v274, %v275
        %v277 = vrot.slane %v276, 1
        %v278 = vadd.f32 %v276, %v277
        %p279 = scmp.eq.s32.totalorder %s13, 0
        // Predicated region
        $region25: #{tpu_custom_call.1} parent=23 // pred_check
          %p280 = pneg %p279
        $region26: #{tpu_custom_call.1} parent=23 // pred_check_branch
          %282 = sbr.rel (%p280) target = $region28
        $region27: #{tpu_custom_call.1} parent=23 // pred_region
          %vm283 = vcmask 254976
          %284 = vst.msk [vmem:[#allocation2] sm:$0x3] %vm283, 0.0
        $region28: #{tpu_custom_call.1} parent=23 // pred_fallthru
          _
        %v285 = vld [vmem:[#allocation2] sm:$0x3]
        %vm286 = vcmask 1040384
        %v287 = vsel %vm286, %v225, %v278
        %v288 = vadd.f32 %v285, %v287
        %vm289 = vcmask 254976
        %290 = vst.msk [vmem:[#allocation2] sm:$0x3] %vm289, %v288
        // Predicated region
        $region29: #{tpu_custom_call.1} parent=23 // pred_check
          %p291 = pneg %p52
        $region30: #{tpu_custom_call.1} parent=23 // pred_check_branch
          %293 = sbr.rel (%p291) target = $region32
        $region31: #{tpu_custom_call.1} parent=23 // pred_region
          %s295 = ssub.s32 32, 32
          %296 = vsyncadd [#allocation3], %s295
          %s298 = sshll.u32 [#allocation2], 4
          %s299 = int_to_ptr.vmem [resolvable:$true] %s298
          %301 = dma.vmem_to_hbm [thread:$0]  %s299, 32, %s1, [#allocation3]
        $region32: #{tpu_custom_call.1} parent=23 // pred_fallthru
          _
        // Predicated region
        $region33: #{tpu_custom_call.1} parent=23 // pred_check
          %p302 = pneg %p52
        $region34: #{tpu_custom_call.1} parent=23 // pred_check_branch
          %304 = sbr.rel (%p302) target = $region36
        $region35: #{tpu_custom_call.1} parent=23 // pred_region
          %305 = dma.done [#allocation3], 32
        $region36: #{tpu_custom_call.1} parent=23 // pred_fallthru
          _
      $region24: #{tpu_custom_call.1} parent=5 // pred_fallthru
        _
      %p306 = scmp.le.s32.totalorder 2, %s8
      // Predicated region
      $region37: #{tpu_custom_call.1} parent=5 // pred_check
        %p307 = pneg %p306
      $region38: #{tpu_custom_call.1} parent=5 // pred_check_branch
        %309 = sbr.rel (%p307) target = $region40
      $region39: #{tpu_custom_call.1} parent=5 // pred_region
        %s310 = ssub.s32 %s8, 2
      $region40: #{tpu_custom_call.1} parent=5 // pred_fallthru
        _
    $region6: #{tpu_custom_call.1} parent=1 // loop_footer
      %s12 = sadd.s32 1, %s8
    $region7: #{tpu_custom_call.1} parent=1 // loop_footer_branch
      %7 = sbr.rel target = $region3
    $region8: #{tpu_custom_call.1} parent=1 // loop_exit
      _
    %311 = vsyncpa [#allocation3], 1
    %s312 = scalar_lea.sflag [#allocation3], 1
    %313 = vsyncpa %s312, 1

</llo_original>
